<compile_context>
chip_gen: v7x
topology: tpu7x:2x2x1
jax: 0.10.0
libtpu: 0.0.40
codegen_flags: <defaults>
</compile_context>

<pallas_src>
import functools
import math

import jax
import jax.numpy as jnp
from jax.experimental import pallas as pl
from jax.experimental.pallas import tpu as pltpu


# ----------------------------------------------------------------------------
# Tiling helper
# ----------------------------------------------------------------------------

def _pick_tile(dim, target, align):
    """Largest tile <= target that exactly divides `dim` and respects `align`
    (sublane=8 / lane=128).  Falls back to the full dim (always legal)."""
    if dim <= target:
        return dim
    t = (target // align) * align
    while t >= align:
        if dim % t == 0:
            return t
        t -= align
    return dim


# ----------------------------------------------------------------------------
# Conv1D (HuggingFace): out = x @ W + b   — tiled, pipelined matmul kernel
# ----------------------------------------------------------------------------

def _matmul_bias_kernel(x_ref, w_ref, b_ref, o_ref, acc_ref):
    # x: (tm, tk), w: (tk, tn), b: (1, tn) -> o: (tm, tn); f32 accumulation.
    @pl.when(pl.program_id(2) == 0)
    def _():
        acc_ref[...] = jnp.zeros_like(acc_ref)

    acc_ref[...] += jnp.dot(x_ref[...], w_ref[...],
                            preferred_element_type=jnp.float32)

    @pl.when(pl.program_id(2) == pl.num_programs(2) - 1)
    def _():
        o_ref[...] = (acc_ref[...] + b_ref[...].astype(jnp.float32)
                      ).astype(o_ref.dtype)


def conv1d_pallas(x, w, b, *, tm=256, tn=512, tk=512):
    """HuggingFace Conv1D: out = x @ w + b.  x: (B, S, nx), w: (nx, nf)."""
    B, S, nx = x.shape
    nf = w.shape[1]
    M = B * S
    x2 = x.reshape(M, nx)

    tm = _pick_tile(M, tm, 8)      # sublane-aligned
    tn = _pick_tile(nf, tn, 128)   # lane-aligned (128-wide MXU friendly on v5e)
    tk = _pick_tile(nx, tk, 128)
    grid = (M // tm, nf // tn, nx // tk)

    out = pl.pallas_call(
        _matmul_bias_kernel,
        out_shape=jax.ShapeDtypeStruct((M, nf), x.dtype),
        grid_spec=pltpu.PrefetchScalarGridSpec(
            num_scalar_prefetch=0,
            grid=grid,
            in_specs=[
                pl.BlockSpec((tm, tk), lambda i, j, k: (i, k)),
                pl.BlockSpec((tk, tn), lambda i, j, k: (k, j)),
                pl.BlockSpec((1, tn), lambda i, j, k: (0, j)),
            ],
            out_specs=pl.BlockSpec((tm, tn), lambda i, j, k: (i, j)),
            scratch_shapes=[pltpu.VMEM((tm, tn), jnp.float32)],
        ),
        compiler_params=pltpu.CompilerParams(
            dimension_semantics=("parallel", "parallel", "arbitrary")),
    )(x2, w, b.reshape(1, nf))
    return out.reshape(B, S, nf)


# ----------------------------------------------------------------------------
# Attention core: all heads of one (batch, Sq-tile) per grid step, merged layout
# ----------------------------------------------------------------------------

def _attn_kernel(q_ref, k_ref, v_ref, o_ref, *, n_head, scale):
    # q_ref: (1, tq, nx), k_ref / v_ref: (1, Sk, nx), o_ref: (1, tq, nx)
    nx = q_ref.shape[-1]
    D = nx // n_head
    q = q_ref[0]
    k = k_ref[0]
    v = v_ref[0]
    inv_sqrt_d = 1.0 / math.sqrt(D)

    # Heads are static lane slices of the merged feature dim; the output block
    # stays nx lanes wide so the HBM writeback is dense.
    for h in range(n_head):
        lo = h * D
        qh = q[:, lo:lo + D]
        kh = k[:, lo:lo + D]
        vh = v[:, lo:lo + D]
        # s = qh @ kh.T (contract last dims; no explicit transpose op).
        s = jax.lax.dot_general(qh, kh, (((1,), (1,)), ((), ())),
                                preferred_element_type=jnp.float32)
        if scale:
            s = s * inv_sqrt_d
        # numerically-stable softmax (matches torch.nn.Softmax)
        m = jnp.max(s, axis=-1, keepdims=True)
        e = jnp.exp(s - m)
        l = jnp.sum(e, axis=-1, keepdims=True)
        p = e * pl.reciprocal(l, approx=True)           # divide on EUP slot
        oh = jnp.dot(p.astype(vh.dtype), vh, preferred_element_type=jnp.float32)
        o_ref[0, :, lo:lo + D] = oh.astype(o_ref.dtype)


def attention_core_pallas(query, key, value, *, n_head, scale, tq=256):
    """query: (B, Sq, nx), key/value: (B, Sk, nx) -> (B, Sq, nx) merged-head."""
    B, Sq, nx = query.shape
    Sk = key.shape[1]
    tq = _pick_tile(Sq, tq, 8)
    kern = functools.partial(_attn_kernel, n_head=n_head, scale=scale)
    return pl.pallas_call(
        kern,
        out_shape=jax.ShapeDtypeStruct((B, Sq, nx), query.dtype),
        grid_spec=pltpu.PrefetchScalarGridSpec(
            num_scalar_prefetch=0,
            grid=(B, Sq // tq),
            in_specs=[
                pl.BlockSpec((1, tq, nx), lambda b, i: (b, i, 0)),
                pl.BlockSpec((1, Sk, nx), lambda b, i: (b, 0, 0)),
                pl.BlockSpec((1, Sk, nx), lambda b, i: (b, 0, 0)),
            ],
            out_specs=pl.BlockSpec((1, tq, nx), lambda b, i: (b, i, 0)),
        ),
        compiler_params=pltpu.CompilerParams(
            dimension_semantics=("parallel", "parallel")),
    )(query, key, value)


# ----------------------------------------------------------------------------
# Module-level forward
# ----------------------------------------------------------------------------

def attention_encoding_forward(inputs, params, *, n_head, scale,
                               compute_dtype=None):
    """inputs: [(B,Sq,nx), (B,Sk,nx), (B,Sv,nx)] with Sk == Sv.

    compute_dtype=jnp.bfloat16 is recommended at production sizes on v6e/v7x
    (bf16 MXU rate, half the HBM/VMEM traffic); accumulation stays f32 inside
    the kernels either way.  Keep f32 on v5e / for toy validation.
    """
    out_dtype = inputs[0].dtype
    cast = (lambda t: t.astype(compute_dtype)) if compute_dtype else (lambda t: t)
    c_attn_w, c_attn_b = cast(params["c_attn_w"]), cast(params["c_attn_b"])
    c_proj_w, c_proj_b = cast(params["c_proj_w"]), cast(params["c_proj_b"])

    # cat -> c_attn -> split  ==  per-input c_attn (Conv1D acts per token), so
    # skip materializing the concatenated activation in HBM entirely.
    query = conv1d_pallas(cast(inputs[0]), c_attn_w, c_attn_b)
    key = conv1d_pallas(cast(inputs[1]), c_attn_w, c_attn_b)
    value = conv1d_pallas(cast(inputs[2]), c_attn_w, c_attn_b)

    B, Sq, nx = query.shape
    Sk = key.shape[1]
    D = nx // n_head

    # Attention stays in merged (B, S, nx) layout end-to-end: no split_heads /
    # merge_heads transposes through HBM; merge_heads is the identity here.
    a = attention_core_pallas(query, key, value, n_head=n_head, scale=scale)
    a = conv1d_pallas(a, c_proj_w, c_proj_b).astype(out_dtype)

    # present = stack((key.transpose(-2,-1), value)) in per-head layout.
    k_h = key.reshape(B, Sk, n_head, D).transpose(0, 2, 1, 3)
    v_h = value.reshape(B, Sk, n_head, D).transpose(0, 2, 1, 3)
    present = jnp.stack((k_h, v_h)).astype(out_dtype)      # (2, B, H, Sk, D)
    # attn_dropout / resid_dropout: identity in eval mode.
    return a, present


def attention_encoding_reference(inputs, params, *, n_head, scale):
    """Pure-JAX reference mirroring the PyTorch forward exactly (concat path)."""
    Sq, Sk, Sv = inputs[0].shape[1], inputs[1].shape[1], inputs[2].shape[1]
    x = jnp.concatenate(inputs, axis=1)
    x = x @ params["c_attn_w"] + params["c_attn_b"]
    query, key, value = x[:, :Sq], x[:, Sq:Sq + Sk], x[:, Sq + Sk:]
    B, _, nx = x.shape
    D = nx // n_head
    sh = lambda t: t.reshape(t.shape[0], t.shape[1], n_head, D).transpose(0, 2, 1, 3)
    q, k, v = sh(query), sh(key), sh(value)
    w = jnp.einsum("bhqd,bhkd->bhqk", q, k)
    if scale:
        w = w / math.sqrt(D)
    w = jax.nn.softmax(w, axis=-1)
    a = jnp.einsum("bhqk,bhkd->bhqd", w, v)
    a = a.transpose(0, 2, 1, 3).reshape(B, Sq, nx)
    a = a @ params["c_proj_w"] + params["c_proj_b"]
    present = jnp.stack((k, v))
    return a, present


# ----------------------------------------------------------------------------
# Main
# ----------------------------------------------------------------------------

if __name__ == "__main__":
    # Small config consistent with the module: nx = 32, n_head = 4, head_dim = 8,
    # batch = 2, each of the 3 inputs has seq = 8.
    B, S, NX, N_HEAD = 2, 8, 32, 4
    SCALE = True  # as used in GPT-2 blocks; module default is False

    key = jax.random.PRNGKey(0)
    k1, k2, k3, k4, k5 = jax.random.split(key, 5)

    # Deterministic parameter init (Conv1D: weight ~ N(0, 0.02), bias = 0).
    params = {
        "c_attn_w": 0.02 * jax.random.normal(k1, (NX, NX), jnp.float32),
        "c_attn_b": jnp.zeros((NX,), jnp.float32),
        "c_proj_w": 0.02 * jax.random.normal(k2, (NX, NX), jnp.float32),
        "c_proj_b": jnp.zeros((NX,), jnp.float32),
    }

    inputs = [
        jax.random.normal(k3, (B, S, NX), jnp.float32),
        jax.random.normal(k4, (B, S, NX), jnp.float32),
        jax.random.normal(k5, (B, S, NX), jnp.float32),
    ]

    a, present = attention_encoding_forward(
        inputs, params, n_head=N_HEAD, scale=SCALE)
    jax.block_until_ready(a)
    jax.block_until_ready(present)

    a_ref, present_ref = attention_encoding_reference(
        inputs, params, n_head=N_HEAD, scale=SCALE)
    assert a.shape == (B, S, NX)
    assert present.shape == (2, B, N_HEAD, S, NX // N_HEAD)
    # slightly loose tolerance to allow for the EUP approx-reciprocal softmax
    assert jnp.allclose(a, a_ref, rtol=2e-3, atol=2e-3)
    assert jnp.allclose(present, present_ref, rtol=1e-3, atol=1e-3)

    print("KERNEL_OK")
</pallas_src>

<mosaic_0001>
module attributes {stable_mosaic.version = 11 : i64} {
  func.func @_matmul_bias_kernel(%arg0: i32, %arg1: i32, %arg2: i32, %arg3: memref<16x32xf32, #tpu.memory_space<vmem>>, %arg4: memref<32x32xf32, #tpu.memory_space<vmem>>, %arg5: memref<1x32xf32, #tpu.memory_space<vmem>>, %arg6: memref<16x32xf32, #tpu.memory_space<vmem>>, %arg7: memref<16x32xf32, #tpu.memory_space<vmem>>) attributes {dimension_semantics = [#tpu.dimension_semantics<parallel>, #tpu.dimension_semantics<parallel>, #tpu.dimension_semantics<arbitrary>], iteration_bounds = array<i64: 1, 1, 1>, scalar_prefetch = 0 : i64, scratch_operands = 1 : i64, tpu.core_type = #tpu.core_type<tc>, window_params = [{transform_indices = @transform_0, window_bounds = array<i64: 16, 32>}, {transform_indices = @transform_1, window_bounds = array<i64: 32, 32>}, {transform_indices = @transform_2, window_bounds = array<i64: 1, 32>}, {transform_indices = @transform_3, window_bounds = array<i64: 16, 32>}]} {
    %c0_i32 = arith.constant 0 : i32
    %0 = arith.cmpi eq, %arg2, %c0_i32 : i32
    %1 = arith.extui %0 : i1 to i32
    %c0_i32_0 = arith.constant 0 : i32
    %2 = arith.cmpi ne, %1, %c0_i32_0 : i32
    scf.if %2 {
      %cst_10 = arith.constant 0.000000e+00 : f32
      %12 = vector.broadcast %cst_10 : f32 to vector<16x32xf32>
      %c0_11 = arith.constant 0 : index
      %c0_12 = arith.constant 0 : index
      %13 = vector.load %arg7[%c0_11, %c0_12] : memref<16x32xf32, #tpu.memory_space<vmem>>, vector<16x32xf32>
      tpu.vector_store %arg7[%c0_11, %c0_12], %12 {strides = array<i32>} : memref<16x32xf32, #tpu.memory_space<vmem>>, vector<16x32xf32>,
    } else {
    }
    %c0 = arith.constant 0 : index
    %c0_1 = arith.constant 0 : index
    %3 = vector.load %arg7[%c0, %c0_1] : memref<16x32xf32, #tpu.memory_space<vmem>>, vector<16x32xf32>
    %c0_2 = arith.constant 0 : index
    %c0_3 = arith.constant 0 : index
    %4 = vector.load %arg3[%c0_2, %c0_3] : memref<16x32xf32, #tpu.memory_space<vmem>>, vector<16x32xf32>
    %c0_4 = arith.constant 0 : index
    %c0_5 = arith.constant 0 : index
    %5 = vector.load %arg4[%c0_4, %c0_5] : memref<32x32xf32, #tpu.memory_space<vmem>>, vector<32x32xf32>
    %cst = arith.constant dense<0.000000e+00> : vector<16x32xf32>
    %6 = tpu.matmul %4, %5, %cst {dimension_numbers = #tpu.dot_dimension_numbers<[1], [0], [0], [1], [0, 0, 1, 1], [], []>} : vector<16x32xf32>, vector<32x32xf32>, vector<16x32xf32> -> vector<16x32xf32>
    %7 = arith.addf %3, %6 : vector<16x32xf32>
    %c0_6 = arith.constant 0 : index
    %c0_7 = arith.constant 0 : index
    %8 = vector.load %arg7[%c0_6, %c0_7] : memref<16x32xf32, #tpu.memory_space<vmem>>, vector<16x32xf32>
    tpu.vector_store %arg7[%c0_6, %c0_7], %7 {strides = array<i32>} : memref<16x32xf32, #tpu.memory_space<vmem>>, vector<16x32xf32>,
    %c0_i32_8 = arith.constant 0 : i32
    %9 = arith.cmpi eq, %arg2, %c0_i32_8 : i32
    %10 = arith.extui %9 : i1 to i32
    %c0_i32_9 = arith.constant 0 : i32
    %11 = arith.cmpi ne, %10, %c0_i32_9 : i32
    scf.if %11 {
      %c0_10 = arith.constant 0 : index
      %c0_11 = arith.constant 0 : index
      %12 = vector.load %arg7[%c0_10, %c0_11] : memref<16x32xf32, #tpu.memory_space<vmem>>, vector<16x32xf32>
      %c0_12 = arith.constant 0 : index
      %c0_13 = arith.constant 0 : index
      %13 = vector.load %arg5[%c0_12, %c0_13] : memref<1x32xf32, #tpu.memory_space<vmem>>, vector<1x32xf32>
      %14 = vector.broadcast %13 : vector<1x32xf32> to vector<16x32xf32>
      %15 = arith.addf %12, %14 : vector<16x32xf32>
      %c0_14 = arith.constant 0 : index
      %c0_15 = arith.constant 0 : index
      %16 = vector.load %arg6[%c0_14, %c0_15] : memref<16x32xf32, #tpu.memory_space<vmem>>, vector<16x32xf32>
      tpu.vector_store %arg6[%c0_14, %c0_15], %15 {strides = array<i32>} : memref<16x32xf32, #tpu.memory_space<vmem>>, vector<16x32xf32>,
    } else {
    }
    return
  }
  func.func @transform_0(%arg0: i32, %arg1: i32, %arg2: i32) -> (i32, i32) {
    %c0_i32 = arith.constant 0 : i32
    return %arg0, %arg2 : i32, i32
  }
  func.func @transform_1(%arg0: i32, %arg1: i32, %arg2: i32) -> (i32, i32) {
    %c0_i32 = arith.constant 0 : i32
    return %arg2, %arg1 : i32, i32
  }
  func.func @transform_2(%arg0: i32, %arg1: i32, %arg2: i32) -> (i32, i32) {
    %c0_i32 = arith.constant 0 : i32
    %c0_i32_0 = arith.constant 0 : i32
    return %c0_i32, %arg1 : i32, i32
  }
  func.func @transform_3(%arg0: i32, %arg1: i32, %arg2: i32) -> (i32, i32) {
    %c0_i32 = arith.constant 0 : i32
    return %arg0, %arg1 : i32, i32
  }
}

</mosaic_0001>

<llo_original>
// kernel: tpu_custom_call.1
$region0: #{tpu_custom_call.1}
  #allocation0 [shape = 'u32[]', space=smem, size = 0x4, offset = 0x4, fixed_abs, tag = 'smem constant byte address 0x4 - core index']
  #allocation1 [shape = 'u32[144,128]{1,0:T(1,128)}', space=vmem, size = 0x12000, scoped, tag = 'internal scratch']
  #allocation2 [shape = 'f32[16,32]{1,0:T(8,128)}', space=vmem, size = 0x2000, scoped, tag = 'scratch operand']
  %s0 = inlined_call_operand.hbm [shape: f32[16,32], index: 0, kind: input, shape index: {}]
  %s1 = inlined_call_operand.hbm [shape: f32[32,32], index: 1, kind: input, shape index: {}]
  %s2 = inlined_call_operand.vmem [shape: f32[1,32], index: 2, kind: input, shape index: {}]
  %s3 = inlined_call_operand.hbm [shape: f32[16,32], index: 3, kind: output, shape index: {}]
  %s4 = sld [smem:[#allocation0]]
  $region38: #{tpu_custom_call.1} parent=0
    _
  %s6 = ssub.s32 1, %s4
  %s7 = scalar_select 0, %s6, %s4
  $region1: #{tpu_custom_call.1} parent=0
    #allocation3 [shape = 'u8[8192]{0}', space=vmem, size = 0x2000, scoped, tag = 'input window, operand 0, single buffered']
    #allocation4 [shape = 's32[1]{0}', space=sflag, size = 0x4, scoped, tag = 'scoped memory for tpu_custom_call.1']
    #allocation5 [shape = 's32[1]{0}', space=sflag, size = 0x4, scoped, tag = 'scoped memory for tpu_custom_call.1']
    #allocation6 [shape = 'u8[16384]{0}', space=vmem, size = 0x4000, scoped, tag = 'input window, operand 1, single buffered']
    #allocation7 [shape = 's32[1]{0}', space=sflag, size = 0x4, scoped, tag = 'scoped memory for tpu_custom_call.1']
    #allocation8 [shape = 'u8[8192]{0}', space=vmem, size = 0x2000, scoped, tag = 'output window, operand 0, single buffered']
    %8 = vsyncpa [#allocation4], 0
    %9 = vsyncpa [#allocation7], 0
    %10 = vsyncpa [#allocation5], 0
    // Predicated region
    $region2: #{tpu_custom_call.1} parent=1 // pred_check
      _
    $region3: #{tpu_custom_call.1} parent=1 // pred_check_branch
      %12 = sbr.rel (0) target = $region5
    $region4: #{tpu_custom_call.1} parent=1 // pred_region
      %s14 = ssub.s32 256, 256
      %15 = vsyncadd [#allocation4], %s14
      %s16 = sshll.u32 [#allocation3], 4
      %s17 = int_to_ptr.vmem [resolvable:$true] %s16
      %22 = dma.hbm_to_vmem [thread:$0]  %s0, 256, %s17, [#allocation4], 128, 128, 8
    $region5: #{tpu_custom_call.1} parent=1 // pred_fallthru
      _
    // Predicated region
    $region6: #{tpu_custom_call.1} parent=1 // pred_check
      _
    $region7: #{tpu_custom_call.1} parent=1 // pred_check_branch
      %24 = sbr.rel (0) target = $region9
    $region8: #{tpu_custom_call.1} parent=1 // pred_region
      %s26 = ssub.s32 512, 512
      %27 = vsyncadd [#allocation7], %s26
      %s28 = sshll.u32 [#allocation6], 4
      %s29 = int_to_ptr.vmem [resolvable:$true] %s28
      %34 = dma.hbm_to_vmem [thread:$0]  %s1, 512, %s29, [#allocation7], 128, 128, 8
    $region9: #{tpu_custom_call.1} parent=1 // pred_fallthru
      _
    // Predicated region
    $region10: #{tpu_custom_call.1} parent=1 // pred_check
      _
    $region11: #{tpu_custom_call.1} parent=1 // pred_check_branch
      %36 = sbr.rel (0) target = $region13
    $region12: #{tpu_custom_call.1} parent=1 // pred_region
      _
    $region13: #{tpu_custom_call.1} parent=1 // pred_fallthru
      _
    // Predicated region
    $region14: #{tpu_custom_call.1} parent=1 // pred_check
      _
    $region15: #{tpu_custom_call.1} parent=1 // pred_check_branch
      %38 = sbr.rel (0) target = $region17
    $region16: #{tpu_custom_call.1} parent=1 // pred_region
      %39 = dma.done [#allocation4], 256
    $region17: #{tpu_custom_call.1} parent=1 // pred_fallthru
      _
    // Predicated region
    $region18: #{tpu_custom_call.1} parent=1 // pred_check
      _
    $region19: #{tpu_custom_call.1} parent=1 // pred_check_branch
      %41 = sbr.rel (0) target = $region21
    $region20: #{tpu_custom_call.1} parent=1 // pred_region
      %42 = dma.done [#allocation7], 512
    $region21: #{tpu_custom_call.1} parent=1 // pred_fallthru
      _
    %p43 = scmp.eq.s32.totalorder 0, 0
    // Predicated region
    $region22: #{tpu_custom_call.1} parent=1 // pred_check
      %p44 = pneg %p43
    $region23: #{tpu_custom_call.1} parent=1 // pred_check_branch
      %46 = sbr.rel (%p44) target = $region25
    $region24: #{tpu_custom_call.1} parent=1 // pred_region
      %vm47 = vcmask 261120
      %48 = vst.msk [vmem:[#allocation2] sm:$0xff] %vm47, 0.0
      %49 = vst.msk [vmem:[#allocation2 + $0x8] sm:$0xff] %vm47, 0.0
    $region25: #{tpu_custom_call.1} parent=1 // pred_fallthru
      _
    %v50 = vld [vmem:[#allocation2] sm:$0xff]
    %v51 = vld [vmem:[#allocation2 + $0x8] sm:$0xff]
    %v52 = vld [vmem:[#allocation3] sm:$0xff]
    %v53 = vld [vmem:[#allocation3 + $0x8] sm:$0xff]
    %v54 = vld [vmem:[#allocation6] sm:$0xff]
    %v55 = vld [vmem:[#allocation6 + $0x8] sm:$0xff]
    %v56 = vld [vmem:[#allocation6 + $0x10] sm:$0xff]
    %v57 = vld [vmem:[#allocation6 + $0x18] sm:$0xff]
    %vm58 = vcmask 261120
    %v60 = vsel %vm58, %v52, 0
    %v63 = vsel %vm58, %v53, 0
    %65 = vmatprep.subr.mxu0 0.0
    %66 = vmatpush1.msra.mxu0 %v54
    %67 = vmatprep.subr.mxu0 0.0
    %68 = vmatpush1.msra.mxu0 %v55
    %69 = vmatprep.subr.mxu0 0.0
    %70 = vmatpush1.msra.mxu0 %v56
    %71 = vmatprep.subr.mxu0 0.0
    %72 = vmatpush1.msra.mxu0 %v57
    %73 = vmatprep.subr.mxu0 0.0
    %74 = vmatpush1.msra.mxu0 0.0
    %75 = vmatprep.subr.mxu0 0.0
    %76 = vmatpush1.msra.mxu0 0.0
    %77 = vmatprep.subr.mxu0 0.0
    %78 = vmatpush1.msra.mxu0 0.0
    %79 = vmatprep.subr.mxu0 0.0
    %80 = vmatpush1.msra.mxu0 0.0
    %81 = vmatprep.subr.mxu0 0.0
    %82 = vmatpush1.msra.mxu0 0.0
    %83 = vmatprep.subr.mxu0 0.0
    %84 = vmatpush1.msra.mxu0 0.0
    %85 = vmatprep.subr.mxu0 0.0
    %86 = vmatpush1.msra.mxu0 0.0
    %87 = vmatprep.subr.mxu0 0.0
    %88 = vmatpush1.msra.mxu0 0.0
    %89 = vmatprep.subr.mxu0 0.0
    %90 = vmatpush1.msra.mxu0 0.0
    %91 = vmatprep.subr.mxu0 0.0
    %92 = vmatpush1.msra.mxu0 0.0
    %93 = vmatprep.subr.mxu0 0.0
    %94 = vmatpush1.msra.mxu0 0.0
    %95 = vmatprep.subr.mxu0 0.0
    %96 = vmatpush1.msra.mxu0 0.0
    %97 = vmatprep.subr.mxu0 0.0
    %98 = vmatpush1.msra.mxu0 0.0
    %99 = vmatprep.subr.mxu0 0.0
    %100 = vmatpush1.msra.mxu0 0.0
    %101 = vmatprep.subr.mxu0 0.0
    %102 = vmatpush1.msra.mxu0 0.0
    %103 = vmatprep.subr.mxu0 0.0
    %104 = vmatpush1.msra.mxu0 0.0
    %105 = vmatprep.subr.mxu0 0.0
    %106 = vmatpush1.msra.mxu0 0.0
    %107 = vmatprep.subr.mxu0 0.0
    %108 = vmatpush1.msra.mxu0 0.0
    %109 = vmatprep.subr.mxu0 0.0
    %110 = vmatpush1.msra.mxu0 0.0
    %111 = vmatprep.subr.mxu0 0.0
    %112 = vmatpush1.msra.mxu0 0.0
    %113 = vmatprep.subr.mxu0 0.0
    %114 = vmatpush1.msra.mxu0 0.0
    %115 = vmatprep.subr.mxu0 0.0
    %116 = vmatpush1.msra.mxu0 0.0
    %117 = vmatprep.subr.mxu0 0.0
    %118 = vmatpush1.msra.mxu0 0.0
    %119 = vmatprep.subr.mxu0 0.0
    %120 = vmatpush1.msra.mxu0 0.0
    %121 = vmatprep.subr.mxu0 0.0
    %122 = vmatpush1.msra.mxu0 0.0
    %123 = vmatprep.subr.mxu0 0.0
    %124 = vmatpush1.msra.mxu0 0.0
    %125 = vmatprep.subr.mxu0 0.0
    %126 = vmatpush1.msra.mxu0 0.0
    %127 = vmatprep.subr.mxu0 0.0
    %128 = vmatpush1.msra.mxu0 0.0
    %129 = vmatprep.mubr.f32.mxu0 0.0
    %130 = vmatmul.mubr.f32.gmra.mrb[0].mxu0 %v60
    %v131 = vpop.f32.mrb[0].mxu0
    %v132 = vadd.f32 0.0, %v131
    %v133 = vpop.f32.mrb[0].mxu0
    %134 = vmatprep.mubr.f32.mxu0 0.0
    %135 = vmatmul.mubr.f32.gmra.mrb[0].mxu0 %v63
    %v136 = vpop.f32.mrb[0].mxu0
    %v137 = vadd.f32 0.0, %v136
    %v138 = vpop.f32.mrb[0].mxu0
    %139 = vdwg.mxu0
    %v140 = vadd.f32 %v50, %v132
    %v141 = vadd.f32 %v51, %v137
    %142 = vst.msk [vmem:[#allocation2] sm:$0xff] %vm58, %v140
    %143 = vst.msk [vmem:[#allocation2 + $0x8] sm:$0xff] %vm58, %v141
    // Predicated region
    $region26: #{tpu_custom_call.1} parent=1 // pred_check
      %p144 = pneg %p43
    $region27: #{tpu_custom_call.1} parent=1 // pred_check_branch
      %146 = sbr.rel (%p144) target = $region29
    $region28: #{tpu_custom_call.1} parent=1 // pred_region
      %v147 = vld [vmem:[#allocation2] sm:$0xff]
      %v148 = vld [vmem:[#allocation2 + $0x8] sm:$0xff]
      %v149 = vld [vmem:[%s2] sm:$0x1]
      %v151 = vlaneseq
      %v152 = vshrl.u32 %v151, 7
      %v153 = vsub.s32 0, %v152
      %v154 = vrot.slane %v149, %v153
      %v156 = vadd.f32 %v147, %v154
      %v157 = vadd.f32 %v148, %v154
      %158 = vst.msk [vmem:[#allocation8] sm:$0xff] %vm58, %v156
      %159 = vst.msk [vmem:[#allocation8 + $0x8] sm:$0xff] %vm58, %v157
    $region29: #{tpu_custom_call.1} parent=1 // pred_fallthru
      _
    // Predicated region
    $region30: #{tpu_custom_call.1} parent=1 // pred_check
      _
    $region31: #{tpu_custom_call.1} parent=1 // pred_check_branch
      %161 = sbr.rel (0) target = $region33
    $region32: #{tpu_custom_call.1} parent=1 // pred_region
      %s163 = ssub.s32 256, 256
      %164 = vsyncadd [#allocation5], %s163
      %s165 = sshll.u32 [#allocation8], 4
      %s166 = int_to_ptr.vmem [resolvable:$true] %s165
      %171 = dma.vmem_to_hbm [thread:$0]  %s166, 256, %s3, [#allocation5], 128, 128, 8
    $region33: #{tpu_custom_call.1} parent=1 // pred_fallthru
      _
    // Predicated region
    $region34: #{tpu_custom_call.1} parent=1 // pred_check
      _
    $region35: #{tpu_custom_call.1} parent=1 // pred_check_branch
      %173 = sbr.rel (0) target = $region37
    $region36: #{tpu_custom_call.1} parent=1 // pred_region
      %174 = dma.done [#allocation5], 256
    $region37: #{tpu_custom_call.1} parent=1 // pred_fallthru
      _
    %175 = vsyncpa [#allocation4], 1
    %176 = vsyncpa [#allocation7], 1
    %177 = vsyncpa [#allocation5], 1

</llo_original>
